<compile_context>
chip_gen: v6e
topology: v6e:2x2x1
jax: 0.10.0
libtpu: 0.0.40
codegen_flags: <defaults>
</compile_context>

<pallas_src>
import jax
import jax.numpy as jnp
from jax.experimental import pallas as pl
from jax.experimental.pallas import tpu as pltpu

NUM_ELEMENTS = 23
K = NUM_ELEMENTS * NUM_ELEMENTS  # 529

# Safe across v5e / v6e / v7x: 2048*529*4 B ~= 4.3 MiB per buffer,
# ~8.7 MiB double-buffered.
TM_MAX = 2048


def _linreg_kernel(x_ref, w_ref, b_ref, o_ref):
    # x_ref: (TM, K)  w_ref: (K, 1)  b_ref: (1, 1)  o_ref: (TM, 1)
    acc = jnp.dot(x_ref[...], w_ref[...], preferred_element_type=jnp.float32)
    o_ref[...] = (acc + b_ref[...]).astype(o_ref.dtype)


def _choose_tile(n, tm_max=TM_MAX):
    if n <= tm_max:
        # Single block covering the full N dim (allowed: block == full dim).
        return n
    # Multi-block path: tile must be a multiple of 8 (sublane constraint).
    return (tm_max // 8) * 8


def linear_regresion_forward(edge_attr, weight, bias):
    """edge_attr: (N, 23, 23) f32; weight: (K, 1) f32; bias: (1, 1) f32 -> (N, 1) f32."""
    n = edge_attr.shape[0]
    # Contiguous reshape -> zero-copy bitcast in XLA (no extra HBM pass).
    x = edge_attr.reshape(n, K)

    tm = _choose_tile(n)
    grid = (pl.cdiv(n, tm),)

    out = pl.pallas_call(
        _linreg_kernel,
        out_shape=jax.ShapeDtypeStruct((n, 1), jnp.float32),
        grid_spec=pl.GridSpec(
            grid=grid,
            in_specs=[
                pl.BlockSpec((tm, K), lambda i: (i, 0)),   # stream rows of x
                pl.BlockSpec((K, 1), lambda i: (0, 0)),    # weight stays resident
                pl.BlockSpec((1, 1), lambda i: (0, 0)),    # bias stays resident
            ],
            out_specs=pl.BlockSpec((tm, 1), lambda i: (i, 0)),
        ),
        compiler_params=pltpu.CompilerParams(
            # Rows are independent: lets the grid shard across TCs (v7x megacore).
            dimension_semantics=("parallel",),
        ),
    )(x, weight, bias)
    return out


def init_params(key):
    # Deterministic init mirroring nn.Linear's U(-1/sqrt(fan_in), 1/sqrt(fan_in)).
    kw, kb = jax.random.split(key)
    bound = 1.0 / jnp.sqrt(jnp.float32(K))
    weight = jax.random.uniform(kw, (K, 1), jnp.float32, -bound, bound)
    bias = jax.random.uniform(kb, (1, 1), jnp.float32, -bound, bound)
    return weight, bias


if __name__ == "__main__":
    key = jax.random.PRNGKey(0)
    k_x, k_p, k_x2 = jax.random.split(key, 3)

    weight, bias = init_params(k_p)

    # Small synthetic "graph": 8 edges, each with a 23x23 edge_attr matrix.
    edge_attr = jax.random.normal(k_x, (8, NUM_ELEMENTS, NUM_ELEMENTS), jnp.float32)
    out = jax.block_until_ready(linear_regresion_forward(edge_attr, weight, bias))
    ref = edge_attr.reshape(-1, K) @ weight + bias
    assert out.shape == (8, 1)
    assert jnp.allclose(out, ref, atol=1e-4, rtol=1e-4)

    # Second check exercising the tiled / ragged-last-tile path (N > TM, N % TM != 0).
    n2 = TM_MAX + 77
    edge_attr2 = jax.random.normal(k_x2, (n2, NUM_ELEMENTS, NUM_ELEMENTS), jnp.float32)
    out2 = jax.block_until_ready(linear_regresion_forward(edge_attr2, weight, bias))
    ref2 = edge_attr2.reshape(-1, K) @ weight + bias
    assert out2.shape == (n2, 1)
    assert jnp.allclose(out2, ref2, atol=1e-4, rtol=1e-4)

    print("KERNEL_OK")
</pallas_src>

<mosaic_0001>
module attributes {stable_mosaic.version = 11 : i64} {
  func.func @_linreg_kernel(%arg0: i32, %arg1: memref<8x529xf32, #tpu.memory_space<vmem>>, %arg2: memref<529x1xf32, #tpu.memory_space<vmem>>, %arg3: memref<1x1xf32, #tpu.memory_space<vmem>>, %arg4: memref<8x1xf32, #tpu.memory_space<vmem>>) attributes {dimension_semantics = [#tpu.dimension_semantics<parallel>], iteration_bounds = array<i64: 1>, scalar_prefetch = 0 : i64, scratch_operands = 0 : i64, tpu.core_type = #tpu.core_type<tc>, window_params = [{transform_indices = @transform_0, window_bounds = array<i64: 8, 529>}, {pipeline_mode = #tpu.pipeline_mode<synchronous>, transform_indices = @transform_1, window_bounds = array<i64: 529, 1>}, {pipeline_mode = #tpu.pipeline_mode<synchronous>, transform_indices = @transform_2, window_bounds = array<i64: 1, 1>}, {transform_indices = @transform_3, window_bounds = array<i64: 8, 1>}]} {
    %c0 = arith.constant 0 : index
    %c0_0 = arith.constant 0 : index
    %0 = vector.load %arg1[%c0, %c0_0] : memref<8x529xf32, #tpu.memory_space<vmem>>, vector<8x529xf32>
    %c0_1 = arith.constant 0 : index
    %c0_2 = arith.constant 0 : index
    %1 = vector.load %arg2[%c0_1, %c0_2] : memref<529x1xf32, #tpu.memory_space<vmem>>, vector<529x1xf32>
    %cst = arith.constant dense<0.000000e+00> : vector<8x1xf32>
    %2 = tpu.matmul %0, %1, %cst {dimension_numbers = #tpu.dot_dimension_numbers<[1], [0], [0], [1], [0, 0, 1, 1], [], []>} : vector<8x529xf32>, vector<529x1xf32>, vector<8x1xf32> -> vector<8x1xf32>
    %c0_3 = arith.constant 0 : index
    %c0_4 = arith.constant 0 : index
    %3 = vector.load %arg3[%c0_3, %c0_4] : memref<1x1xf32, #tpu.memory_space<vmem>>, vector<1x1xf32>
    %4 = vector.broadcast %3 : vector<1x1xf32> to vector<8x1xf32>
    %5 = arith.addf %2, %4 : vector<8x1xf32>
    %c0_5 = arith.constant 0 : index
    %c0_6 = arith.constant 0 : index
    %6 = vector.load %arg4[%c0_5, %c0_6] : memref<8x1xf32, #tpu.memory_space<vmem>>, vector<8x1xf32>
    tpu.vector_store %arg4[%c0_5, %c0_6], %5 {strides = array<i32>} : memref<8x1xf32, #tpu.memory_space<vmem>>, vector<8x1xf32>,
    return
  }
  func.func @transform_0(%arg0: i32) -> (i32, i32) {
    %c0_i32 = arith.constant 0 : i32
    %c0_i32_0 = arith.constant 0 : i32
    return %arg0, %c0_i32 : i32, i32
  }
  func.func @transform_1(%arg0: i32) -> (i32, i32) {
    %c0_i32 = arith.constant 0 : i32
    %c0_i32_0 = arith.constant 0 : i32
    %c0_i32_1 = arith.constant 0 : i32
    return %c0_i32, %c0_i32_0 : i32, i32
  }
  func.func @transform_2(%arg0: i32) -> (i32, i32) {
    %c0_i32 = arith.constant 0 : i32
    %c0_i32_0 = arith.constant 0 : i32
    %c0_i32_1 = arith.constant 0 : i32
    return %c0_i32, %c0_i32_0 : i32, i32
  }
  func.func @transform_3(%arg0: i32) -> (i32, i32) {
    %c0_i32 = arith.constant 0 : i32
    %c0_i32_0 = arith.constant 0 : i32
    return %arg0, %c0_i32 : i32, i32
  }
}

</mosaic_0001>

<llo_original>
// kernel: tpu_custom_call.1
$region0: #{tpu_custom_call.1}
  #allocation0 [shape = 'u32[]', space=smem, size = 0x4, offset = 0x4, fixed_abs, tag = 'smem constant byte address 0x4 - core index']
  #allocation1 [shape = 'u32[144,128]{1,0:T(1,128)}', space=vmem, size = 0x12000, scoped, tag = 'internal scratch']
  #allocation2 [shape = 'f32[1,1]{1,0:T(1,128)S(1)}', space=vmem, size = 0x200, scoped, tag = 'scoped memory for tpu_custom_call.1']
  %s0 = inlined_call_operand.vmem [shape: f32[8,529], index: 0, kind: input, shape index: {}]
  %s1 = inlined_call_operand.vmem [shape: f32[529,1], index: 1, kind: input, shape index: {}]
  %s2 = inlined_call_operand.<no memory space> [shape: f32[1,1], index: 2, kind: input, shape index: {}]
  %s3 = inlined_call_operand.vmem [shape: f32[8,1], index: 3, kind: output, shape index: {}]
  %s4 = sld [smem:[#allocation0]]
  $region22: #{tpu_custom_call.1} parent=0
    _
  %s6 = ssub.s32 1, %s4
  %s7 = scalar_select 0, %s6, %s4
  %v8 = vstv %s2
  %9 = vst [vmem:[#allocation2] sm:$0x1] %v8
  // Predicated region
  $region2: #{tpu_custom_call.1} parent=0 // pred_check
    _
  $region3: #{tpu_custom_call.1} parent=0 // pred_check_branch
    %11 = sbr.rel (0) target = $region5
  $region4: #{tpu_custom_call.1} parent=0 // pred_region
    _
  $region5: #{tpu_custom_call.1} parent=0 // pred_fallthru
    _
  // Predicated region
  $region6: #{tpu_custom_call.1} parent=0 // pred_check
    _
  $region7: #{tpu_custom_call.1} parent=0 // pred_check_branch
    %13 = sbr.rel (0) target = $region9
  $region8: #{tpu_custom_call.1} parent=0 // pred_region
    _
  $region9: #{tpu_custom_call.1} parent=0 // pred_fallthru
    _
  // Predicated region
  $region10: #{tpu_custom_call.1} parent=0 // pred_check
    _
  $region11: #{tpu_custom_call.1} parent=0 // pred_check_branch
    %15 = sbr.rel (0) target = $region13
  $region12: #{tpu_custom_call.1} parent=0 // pred_region
    _
  $region13: #{tpu_custom_call.1} parent=0 // pred_fallthru
    _
  %v16 = vld [vmem:[%s0] sm:$0xff]
  %v17 = vld [vmem:[%s0 + $0x8] sm:$0xff]
  %v18 = vld [vmem:[%s0 + $0x10] sm:$0xff]
  %v19 = vld [vmem:[%s0 + $0x18] sm:$0xff]
  %v20 = vld [vmem:[%s0 + $0x20] sm:$0xff]
  %v21 = vld [vmem:[%s1] sm:$0xff]
  %v22 = vld [vmem:[%s1 + $0x8] sm:$0xff]
  %v23 = vld [vmem:[%s1 + $0x10] sm:$0xff]
  %v24 = vld [vmem:[%s1 + $0x18] sm:$0xff]
  %v25 = vld [vmem:[%s1 + $0x20] sm:$0xff]
  %v26 = vld [vmem:[%s1 + $0x28] sm:$0xff]
  %v27 = vld [vmem:[%s1 + $0x30] sm:$0xff]
  %v28 = vld [vmem:[%s1 + $0x38] sm:$0xff]
  %v29 = vld [vmem:[%s1 + $0x40] sm:$0xff]
  %v30 = vld [vmem:[%s1 + $0x48] sm:$0xff]
  %v31 = vld [vmem:[%s1 + $0x50] sm:$0xff]
  %v32 = vld [vmem:[%s1 + $0x58] sm:$0xff]
  %v33 = vld [vmem:[%s1 + $0x60] sm:$0xff]
  %v34 = vld [vmem:[%s1 + $0x68] sm:$0xff]
  %v35 = vld [vmem:[%s1 + $0x70] sm:$0xff]
  %v36 = vld [vmem:[%s1 + $0x78] sm:$0xff]
  %v37 = vld [vmem:[%s1 + $0x80] sm:$0xff]
  %v38 = vld [vmem:[%s1 + $0x88] sm:$0xff]
  %v39 = vld [vmem:[%s1 + $0x90] sm:$0xff]
  %v40 = vld [vmem:[%s1 + $0x98] sm:$0xff]
  %v41 = vld [vmem:[%s1 + $0xa0] sm:$0xff]
  %v42 = vld [vmem:[%s1 + $0xa8] sm:$0xff]
  %v43 = vld [vmem:[%s1 + $0xb0] sm:$0xff]
  %v44 = vld [vmem:[%s1 + $0xb8] sm:$0xff]
  %v45 = vld [vmem:[%s1 + $0xc0] sm:$0xff]
  %v46 = vld [vmem:[%s1 + $0xc8] sm:$0xff]
  %v47 = vld [vmem:[%s1 + $0xd0] sm:$0xff]
  %v48 = vld [vmem:[%s1 + $0xd8] sm:$0xff]
  %v49 = vld [vmem:[%s1 + $0xe0] sm:$0xff]
  %v50 = vld [vmem:[%s1 + $0xe8] sm:$0xff]
  %v51 = vld [vmem:[%s1 + $0xf0] sm:$0xff]
  %v52 = vld [vmem:[%s1 + $0xf8] sm:$0xff]
  %v53 = vld [vmem:[%s1 + $0x100] sm:$0xff]
  %v54 = vld [vmem:[%s1 + $0x108] sm:$0xff]
  %v55 = vld [vmem:[%s1 + $0x110] sm:$0xff]
  %v56 = vld [vmem:[%s1 + $0x118] sm:$0xff]
  %v57 = vld [vmem:[%s1 + $0x120] sm:$0xff]
  %v58 = vld [vmem:[%s1 + $0x128] sm:$0xff]
  %v59 = vld [vmem:[%s1 + $0x130] sm:$0xff]
  %v60 = vld [vmem:[%s1 + $0x138] sm:$0xff]
  %v61 = vld [vmem:[%s1 + $0x140] sm:$0xff]
  %v62 = vld [vmem:[%s1 + $0x148] sm:$0xff]
  %v63 = vld [vmem:[%s1 + $0x150] sm:$0xff]
  %v64 = vld [vmem:[%s1 + $0x158] sm:$0xff]
  %v65 = vld [vmem:[%s1 + $0x160] sm:$0xff]
  %v66 = vld [vmem:[%s1 + $0x168] sm:$0xff]
  %v67 = vld [vmem:[%s1 + $0x170] sm:$0xff]
  %v68 = vld [vmem:[%s1 + $0x178] sm:$0xff]
  %v69 = vld [vmem:[%s1 + $0x180] sm:$0xff]
  %v70 = vld [vmem:[%s1 + $0x188] sm:$0xff]
  %v71 = vld [vmem:[%s1 + $0x190] sm:$0xff]
  %v72 = vld [vmem:[%s1 + $0x198] sm:$0xff]
  %v73 = vld [vmem:[%s1 + $0x1a0] sm:$0xff]
  %v74 = vld [vmem:[%s1 + $0x1a8] sm:$0xff]
  %v75 = vld [vmem:[%s1 + $0x1b0] sm:$0xff]
  %v76 = vld [vmem:[%s1 + $0x1b8] sm:$0xff]
  %v77 = vld [vmem:[%s1 + $0x1c0] sm:$0xff]
  %v78 = vld [vmem:[%s1 + $0x1c8] sm:$0xff]
  %v79 = vld [vmem:[%s1 + $0x1d0] sm:$0xff]
  %v80 = vld [vmem:[%s1 + $0x1d8] sm:$0xff]
  %v81 = vld [vmem:[%s1 + $0x1e0] sm:$0xff]
  %v82 = vld [vmem:[%s1 + $0x1e8] sm:$0xff]
  %v83 = vld [vmem:[%s1 + $0x1f0] sm:$0xff]
  %v84 = vld [vmem:[%s1 + $0x1f8] sm:$0xff]
  %v85 = vld [vmem:[%s1 + $0x200] sm:$0xff]
  %v86 = vld [vmem:[%s1 + $0x208] sm:$0xff]
  %v87 = vld [vmem:[%s1 + $0x210] sm:$0x1]
  %v88 = vld [vmem:[#allocation2] sm:$0x1]
  %v90 = vlaneseq
  %v91 = vshrl.u32 %v90, 7
  %v92 = vsub.s32 0, %v91
  %v93 = vrot.slane %v88, %v92
  %vm95 = vcmask 138240
  %v97 = vsel %vm95, %v20, 0
  %vm99 = vcmask 1040384
  %v101 = vsel %vm99, %v87, 0
  %103 = vmatprep.subr.mxu0 0.0
  %104 = vmatpush1.msra.mxu0 %v36
  %105 = vmatprep.subr.mxu0 0.0
  %106 = vmatpush1.msra.mxu0 %v35
  %107 = vmatprep.subr.mxu0 0.0
  %108 = vmatpush1.msra.mxu0 %v34
  %109 = vmatprep.subr.mxu0 0.0
  %110 = vmatpush1.msra.mxu0 %v33
  %111 = vmatprep.subr.mxu0 0.0
  %112 = vmatpush1.msra.mxu0 %v32
  %113 = vmatprep.subr.mxu0 0.0
  %114 = vmatpush1.msra.mxu0 %v31
  %115 = vmatprep.subr.mxu0 0.0
  %116 = vmatpush1.msra.mxu0 %v30
  %117 = vmatprep.subr.mxu0 0.0
  %118 = vmatpush1.msra.mxu0 %v29
  %119 = vmatprep.subr.mxu0 0.0
  %120 = vmatpush1.msra.mxu0 %v28
  %121 = vmatprep.subr.mxu0 0.0
  %122 = vmatpush1.msra.mxu0 %v27
  %123 = vmatprep.subr.mxu0 0.0
  %124 = vmatpush1.msra.mxu0 %v26
  %125 = vmatprep.subr.mxu0 0.0
  %126 = vmatpush1.msra.mxu0 %v25
  %127 = vmatprep.subr.mxu0 0.0
  %128 = vmatpush1.msra.mxu0 %v24
  %129 = vmatprep.subr.mxu0 0.0
  %130 = vmatpush1.msra.mxu0 %v23
  %131 = vmatprep.subr.mxu0 0.0
  %132 = vmatpush1.msra.mxu0 %v22
  %133 = vmatprep.subr.mxu0 0.0
  %134 = vmatpush1.msra.mxu0 %v21
  %135 = vmatprep.subr.mxu0 0.0
  %136 = vmatpush2.msra.mxu0 %v52
  %137 = vmatprep.subr.mxu0 0.0
  %138 = vmatpush2.msra.mxu0 %v51
  %139 = vmatprep.subr.mxu0 0.0
  %140 = vmatpush2.msra.mxu0 %v50
  %141 = vmatprep.subr.mxu0 0.0
  %142 = vmatpush2.msra.mxu0 %v49
  %143 = vmatprep.subr.mxu0 0.0
  %144 = vmatpush2.msra.mxu0 %v48
  %145 = vmatprep.subr.mxu0 0.0
  %146 = vmatpush2.msra.mxu0 %v47
  %147 = vmatprep.subr.mxu0 0.0
  %148 = vmatpush2.msra.mxu0 %v46
  %149 = vmatprep.subr.mxu0 0.0
  %150 = vmatpush2.msra.mxu0 %v45
  %151 = vmatprep.subr.mxu0 0.0
  %152 = vmatpush2.msra.mxu0 %v44
  %153 = vmatprep.subr.mxu0 0.0
  %154 = vmatpush2.msra.mxu0 %v43
  %155 = vmatprep.subr.mxu0 0.0
  %156 = vmatpush2.msra.mxu0 %v42
  %157 = vmatprep.subr.mxu0 0.0
  %158 = vmatpush2.msra.mxu0 %v41
  %159 = vmatprep.subr.mxu0 0.0
  %160 = vmatpush2.msra.mxu0 %v40
  %161 = vmatprep.subr.mxu0 0.0
  %162 = vmatpush2.msra.mxu0 %v39
  %163 = vmatprep.subr.mxu0 0.0
  %164 = vmatpush2.msra.mxu0 %v38
  %165 = vmatprep.subr.mxu0 0.0
  %166 = vmatpush2.msra.mxu0 %v37
  %167 = vmatprep.mubr.f32.mxu0 %v17
  %168 = vmatmul.mubr.f32.gmra.mxu0 %v16
  %v169 = vpop.f32.mrf.mxu0
  %v170 = vadd.f32 %v93, %v169
  %v171 = vpop.f32.mrf.mxu0
  %172 = vdwg.mxu0
  %173 = vmatprep.subr.mxu0 0.0
  %174 = vmatpush1.msra.mxu0 %v68
  %175 = vmatprep.subr.mxu0 0.0
  %176 = vmatpush1.msra.mxu0 %v67
  %177 = vmatprep.subr.mxu0 0.0
  %178 = vmatpush1.msra.mxu0 %v66
  %179 = vmatprep.subr.mxu0 0.0
  %180 = vmatpush1.msra.mxu0 %v65
  %181 = vmatprep.subr.mxu0 0.0
  %182 = vmatpush1.msra.mxu0 %v64
  %183 = vmatprep.subr.mxu0 0.0
  %184 = vmatpush1.msra.mxu0 %v63
  %185 = vmatprep.subr.mxu0 0.0
  %186 = vmatpush1.msra.mxu0 %v62
  %187 = vmatprep.subr.mxu0 0.0
  %188 = vmatpush1.msra.mxu0 %v61
  %189 = vmatprep.subr.mxu0 0.0
  %190 = vmatpush1.msra.mxu0 %v60
  %191 = vmatprep.subr.mxu0 0.0
  %192 = vmatpush1.msra.mxu0 %v59
  %193 = vmatprep.subr.mxu0 0.0
  %194 = vmatpush1.msra.mxu0 %v58
  %195 = vmatprep.subr.mxu0 0.0
  %196 = vmatpush1.msra.mxu0 %v57
  %197 = vmatprep.subr.mxu0 0.0
  %198 = vmatpush1.msra.mxu0 %v56
  %199 = vmatprep.subr.mxu0 0.0
  %200 = vmatpush1.msra.mxu0 %v55
  %201 = vmatprep.subr.mxu0 0.0
  %202 = vmatpush1.msra.mxu0 %v54
  %203 = vmatprep.subr.mxu0 0.0
  %204 = vmatpush1.msra.mxu0 %v53
  %205 = vmatprep.subr.mxu0 0.0
  %206 = vmatpush2.msra.mxu0 %v84
  %207 = vmatprep.subr.mxu0 0.0
  %208 = vmatpush2.msra.mxu0 %v83
  %209 = vmatprep.subr.mxu0 0.0
  %210 = vmatpush2.msra.mxu0 %v82
  %211 = vmatprep.subr.mxu0 0.0
  %212 = vmatpush2.msra.mxu0 %v81
  %213 = vmatprep.subr.mxu0 0.0
  %214 = vmatpush2.msra.mxu0 %v80
  %215 = vmatprep.subr.mxu0 0.0
  %216 = vmatpush2.msra.mxu0 %v79
  %217 = vmatprep.subr.mxu0 0.0
  %218 = vmatpush2.msra.mxu0 %v78
  %219 = vmatprep.subr.mxu0 0.0
  %220 = vmatpush2.msra.mxu0 %v77
  %221 = vmatprep.subr.mxu0 0.0
  %222 = vmatpush2.msra.mxu0 %v76
  %223 = vmatprep.subr.mxu0 0.0
  %224 = vmatpush2.msra.mxu0 %v75
  %225 = vmatprep.subr.mxu0 0.0
  %226 = vmatpush2.msra.mxu0 %v74
  %227 = vmatprep.subr.mxu0 0.0
  %228 = vmatpush2.msra.mxu0 %v73
  %229 = vmatprep.subr.mxu0 0.0
  %230 = vmatpush2.msra.mxu0 %v72
  %231 = vmatprep.subr.mxu0 0.0
  %232 = vmatpush2.msra.mxu0 %v71
  %233 = vmatprep.subr.mxu0 0.0
  %234 = vmatpush2.msra.mxu0 %v70
  %235 = vmatprep.subr.mxu0 0.0
  %236 = vmatpush2.msra.mxu0 %v69
  %237 = vmatprep.mubr.f32.mxu0 %v19
  %238 = vmatmul.mubr.f32.gmra.mxu0 %v18
  %v239 = vpop.f32.mrf.mxu0
  %v240 = vadd.f32 %v170, %v239
  %v241 = vpop.f32.mrf.mxu0
  %242 = vdwg.mxu0
  %243 = vmatprep.subr.mxu0 0.0
  %244 = vmatpush1.msra.mxu0 0.0
  %245 = vmatprep.subr.mxu0 0.0
  %246 = vmatpush1.msra.mxu0 0.0
  %247 = vmatprep.subr.mxu0 0.0
  %248 = vmatpush1.msra.mxu0 0.0
  %249 = vmatprep.subr.mxu0 0.0
  %250 = vmatpush1.msra.mxu0 0.0
  %251 = vmatprep.subr.mxu0 0.0
  %252 = vmatpush1.msra.mxu0 0.0
  %253 = vmatprep.subr.mxu0 0.0
  %254 = vmatpush1.msra.mxu0 0.0
  %255 = vmatprep.subr.mxu0 0.0
  %256 = vmatpush1.msra.mxu0 0.0
  %257 = vmatprep.subr.mxu0 0.0
  %258 = vmatpush1.msra.mxu0 0.0
  %259 = vmatprep.subr.mxu0 0.0
  %260 = vmatpush1.msra.mxu0 0.0
  %261 = vmatprep.subr.mxu0 0.0
  %262 = vmatpush1.msra.mxu0 0.0
  %263 = vmatprep.subr.mxu0 0.0
  %264 = vmatpush1.msra.mxu0 0.0
  %265 = vmatprep.subr.mxu0 0.0
  %266 = vmatpush1.msra.mxu0 0.0
  %267 = vmatprep.subr.mxu0 0.0
  %268 = vmatpush1.msra.mxu0 0.0
  %269 = vmatprep.subr.mxu0 0.0
  %270 = vmatpush1.msra.mxu0 %v101
  %271 = vmatprep.subr.mxu0 0.0
  %272 = vmatpush1.msra.mxu0 %v86
  %273 = vmatprep.subr.mxu0 0.0
  %274 = vmatpush1.msra.mxu0 %v85
  %275 = vmatprep.subr.mxu0 0.0
  %276 = vmatpush2.msra.mxu0 0.0
  %277 = vmatprep.subr.mxu0 0.0
  %278 = vmatpush2.msra.mxu0 0.0
  %279 = vmatprep.subr.mxu0 0.0
  %280 = vmatpush2.msra.mxu0 0.0
  %281 = vmatprep.subr.mxu0 0.0
  %282 = vmatpush2.msra.mxu0 0.0
  %283 = vmatprep.subr.mxu0 0.0
  %284 = vmatpush2.msra.mxu0 0.0
  %285 = vmatprep.subr.mxu0 0.0
  %286 = vmatpush2.msra.mxu0 0.0
  %287 = vmatprep.subr.mxu0 0.0
  %288 = vmatpush2.msra.mxu0 0.0
  %289 = vmatprep.subr.mxu0 0.0
  %290 = vmatpush2.msra.mxu0 0.0
  %291 = vmatprep.subr.mxu0 0.0
  %292 = vmatpush2.msra.mxu0 0.0
  %293 = vmatprep.subr.mxu0 0.0
  %294 = vmatpush2.msra.mxu0 0.0
  %295 = vmatprep.subr.mxu0 0.0
  %296 = vmatpush2.msra.mxu0 0.0
  %297 = vmatprep.subr.mxu0 0.0
  %298 = vmatpush2.msra.mxu0 0.0
  %299 = vmatprep.subr.mxu0 0.0
  %300 = vmatpush2.msra.mxu0 0.0
  %301 = vmatprep.subr.mxu0 0.0
  %302 = vmatpush2.msra.mxu0 0.0
  %303 = vmatprep.subr.mxu0 0.0
  %304 = vmatpush2.msra.mxu0 0.0
  %305 = vmatprep.subr.mxu0 0.0
  %306 = vmatpush2.msra.mxu0 0.0
  %307 = vmatprep.mubr.f32.mxu0 0.0
  %308 = vmatmul.mubr.f32.gmra.mxu0 %v97
  %v309 = vpop.f32.mrf.mxu0
  %v310 = vadd.f32 %v240, %v309
  %v311 = vpop.f32.mrf.mxu0
  %312 = vdwg.mxu0
  %vm313 = vcmask 7168
  %314 = vst.msk [vmem:[%s3] sm:$0xff] %vm313, %v310
  // Predicated region
  $region14: #{tpu_custom_call.1} parent=0 // pred_check
    _
  $region15: #{tpu_custom_call.1} parent=0 // pred_check_branch
    %316 = sbr.rel (0) target = $region17
  $region16: #{tpu_custom_call.1} parent=0 // pred_region
    _
  $region17: #{tpu_custom_call.1} parent=0 // pred_fallthru
    _
  // Predicated region
  $region18: #{tpu_custom_call.1} parent=0 // pred_check
    _
  $region19: #{tpu_custom_call.1} parent=0 // pred_check_branch
    %318 = sbr.rel (0) target = $region21
  $region20: #{tpu_custom_call.1} parent=0 // pred_region
    _
  $region21: #{tpu_custom_call.1} parent=0 // pred_fallthru
    _

</llo_original>
